<compile_context>
chip_gen: v6e
topology: v6e:2x2x1
jax: 0.10.0
libtpu: 0.0.40
codegen_flags: <defaults>
</compile_context>

<pallas_src>
import jax
import jax.numpy as jnp
from jax.experimental import pallas as pl
from jax.experimental.pallas import tpu as pltpu


def _round_up(x, m):
    return ((x + m - 1) // m) * m


def _largest_tile(h_pad, candidates=(512, 256, 128)):
    for c in candidates:
        if h_pad % c == 0:
            return c
    return 128


# ---------- Path A: whole weight resident in VMEM, 1-D grid over rows ----------
def _enhance_kernel_resident(x_ref, wt_ref, b_ref, o_ref):
    # x_ref:  (tm, H_pad)     row tile of x
    # wt_ref: (H_pad, H_pad)  full pre-transposed weight (constant across grid)
    # b_ref:  (1, H_pad)      bias
    # o_ref:  (tm, H_pad)     output tile
    y = jnp.dot(x_ref[...], wt_ref[...], preferred_element_type=jnp.float32)
    y = y + b_ref[...].astype(jnp.float32)
    o_ref[...] = (y * jax.nn.sigmoid(y)).astype(o_ref.dtype)


# ---------- Path B: (K, N)-tiled weight with f32 accumulator ----------
def _enhance_kernel_tiled(x_ref, wt_ref, b_ref, o_ref, acc_ref):
    # x_ref:  (tm, tk)  row tile of x
    # wt_ref: (tk, tn)  tile of W^T, contraction on tk
    # b_ref:  (1, tn)   bias slice
    # o_ref:  (tm, tn)  output tile
    # acc_ref:(tm, tn)  f32 accumulator, persists across the k grid axis
    k = pl.program_id(2)

    @pl.when(k == 0)
    def _():
        acc_ref[...] = jnp.zeros_like(acc_ref)

    acc_ref[...] += jnp.dot(
        x_ref[...], wt_ref[...], preferred_element_type=jnp.float32
    )

    @pl.when(k == pl.num_programs(2) - 1)
    def _():
        y = acc_ref[...] + b_ref[...].astype(jnp.float32)
        o_ref[...] = (y * jax.nn.sigmoid(y)).astype(o_ref.dtype)


def enhance_controlnet(x, weight, bias, *, tm=256, resident_max_k=1024):
    """y = SiLU(x @ weight.T + bias).

    x: (..., H), weight: (H, H) (nn.Linear layout: [out, in]), bias: (H,).
    """
    orig_shape = x.shape
    H = orig_shape[-1]
    x2d = x.reshape(-1, H)
    M = x2d.shape[0]

    # Lane-dense hidden dim.
    H_pad = _round_up(H, 128)

    # Row tile: shrink for tiny inputs so we don't pad far past M.
    tm_eff = min(tm, _round_up(M, 8))
    M_pad = _round_up(M, tm_eff)

    xp = x2d
    if (M_pad, H_pad) != (M, H):
        xp = jnp.pad(x2d, ((0, M_pad - M), (0, H_pad - H)))

    # Pre-transpose the weight once in XLA (nn.Linear computes x @ W^T) and
    # match the activation dtype so the MXU gets a uniform-precision contraction.
    wt = weight.T.astype(x.dtype)
    if H_pad != H:
        wt = jnp.pad(wt, ((0, H_pad - H), (0, H_pad - H)))
        b2d = jnp.pad(bias, (0, H_pad - H)).reshape(1, H_pad)
    else:
        b2d = bias.reshape(1, H_pad)

    itemsize = jnp.dtype(x.dtype).itemsize
    cost = pl.CostEstimate(
        flops=2 * M_pad * H_pad * H_pad,
        transcendentals=M_pad * H_pad,
        bytes_accessed=(xp.size + wt.size + b2d.size + M_pad * H_pad) * itemsize,
    )

    if H_pad <= resident_max_k:
        # ---- Path A: weight fully resident, grid over row tiles only ----
        grid = (M_pad // tm_eff,)
        out2d = pl.pallas_call(
            _enhance_kernel_resident,
            out_shape=jax.ShapeDtypeStruct((M_pad, H_pad), x.dtype),
            grid_spec=pltpu.PrefetchScalarGridSpec(
                num_scalar_prefetch=0,
                grid=grid,
                in_specs=[
                    pl.BlockSpec((tm_eff, H_pad), lambda i: (i, 0)),   # x rows
                    pl.BlockSpec((H_pad, H_pad), lambda i: (0, 0)),    # W^T (resident)
                    pl.BlockSpec((1, H_pad), lambda i: (0, 0)),        # bias
                ],
                out_specs=pl.BlockSpec((tm_eff, H_pad), lambda i: (i, 0)),
            ),
            compiler_params=pltpu.CompilerParams(
                dimension_semantics=("parallel",),
            ),
            cost_estimate=cost,
        )(xp, wt, b2d)
    else:
        # ---- Path B: tile weight over (K, N), f32 accumulator, K last ----
        tn = _largest_tile(H_pad)
        tk = tn
        grid = (M_pad // tm_eff, H_pad // tn, H_pad // tk)
        out2d = pl.pallas_call(
            _enhance_kernel_tiled,
            out_shape=jax.ShapeDtypeStruct((M_pad, H_pad), x.dtype),
            grid_spec=pltpu.PrefetchScalarGridSpec(
                num_scalar_prefetch=0,
                grid=grid,
                in_specs=[
                    pl.BlockSpec((tm_eff, tk), lambda i, j, k: (i, k)),  # x row tile
                    pl.BlockSpec((tk, tn), lambda i, j, k: (k, j)),      # W^T tile
                    pl.BlockSpec((1, tn), lambda i, j, k: (0, j)),       # bias slice
                ],
                out_specs=pl.BlockSpec((tm_eff, tn), lambda i, j, k: (i, j)),
                scratch_shapes=[pltpu.VMEM((tm_eff, tn), jnp.float32)],
            ),
            compiler_params=pltpu.CompilerParams(
                dimension_semantics=("parallel", "parallel", "arbitrary"),
            ),
            cost_estimate=cost,
        )(xp, wt, b2d)

    out2d = out2d[:M, :H]
    return out2d.reshape(orig_shape)


if __name__ == "__main__":
    batch, seq, hidden = 2, 8, 32

    key = jax.random.PRNGKey(0)
    x = jax.random.normal(key, (batch, seq, hidden), dtype=jnp.float32)

    # Deterministic parameter init matching the module's __init__:
    #   nn.init.eye_(linear.weight), nn.init.zeros_(linear.bias)
    weight = jnp.eye(hidden, dtype=jnp.float32)
    bias = jnp.zeros((hidden,), dtype=jnp.float32)

    out = enhance_controlnet(x, weight, bias)
    out = jax.block_until_ready(out)

    # Reference check (identity weight, zero bias -> SiLU(x)).
    ref = x * jax.nn.sigmoid(x)
    assert out.shape == x.shape
    assert jnp.allclose(out, ref, atol=1e-5), "mismatch vs reference"

    print("KERNEL_OK")
</pallas_src>

<mosaic_0001>
module attributes {stable_mosaic.version = 11 : i64} {
  func.func @_enhance_kernel_resident(%arg0: i32, %arg1: memref<16x128xf32, #tpu.memory_space<vmem>>, %arg2: memref<128x128xf32, #tpu.memory_space<vmem>>, %arg3: memref<1x128xf32, #tpu.memory_space<vmem>>, %arg4: memref<16x128xf32, #tpu.memory_space<vmem>>) attributes {dimension_semantics = [#tpu.dimension_semantics<parallel>], iteration_bounds = array<i64: 1>, scalar_prefetch = 0 : i64, scratch_operands = 0 : i64, tpu.core_type = #tpu.core_type<tc>, window_params = [{transform_indices = @transform_0, window_bounds = array<i64: 16, 128>}, {pipeline_mode = #tpu.pipeline_mode<synchronous>, transform_indices = @transform_1, window_bounds = array<i64: 128, 128>}, {pipeline_mode = #tpu.pipeline_mode<synchronous>, transform_indices = @transform_2, window_bounds = array<i64: 1, 128>}, {transform_indices = @transform_3, window_bounds = array<i64: 16, 128>}]} {
    %c0 = arith.constant 0 : index
    %c0_0 = arith.constant 0 : index
    %0 = vector.load %arg1[%c0, %c0_0] : memref<16x128xf32, #tpu.memory_space<vmem>>, vector<16x128xf32>
    %c0_1 = arith.constant 0 : index
    %c0_2 = arith.constant 0 : index
    %1 = vector.load %arg2[%c0_1, %c0_2] : memref<128x128xf32, #tpu.memory_space<vmem>>, vector<128x128xf32>
    %cst = arith.constant dense<0.000000e+00> : vector<16x128xf32>
    %2 = tpu.matmul %0, %1, %cst {dimension_numbers = #tpu.dot_dimension_numbers<[1], [0], [0], [1], [0, 0, 1, 1], [], []>} : vector<16x128xf32>, vector<128x128xf32>, vector<16x128xf32> -> vector<16x128xf32>
    %c0_3 = arith.constant 0 : index
    %c0_4 = arith.constant 0 : index
    %3 = vector.load %arg3[%c0_3, %c0_4] : memref<1x128xf32, #tpu.memory_space<vmem>>, vector<1x128xf32>
    %4 = vector.broadcast %3 : vector<1x128xf32> to vector<16x128xf32>
    %5 = arith.addf %2, %4 : vector<16x128xf32>
    %6 = arith.negf %5 : vector<16x128xf32>
    %7 = math.exp %6 : vector<16x128xf32>
    %cst_5 = arith.constant 1.000000e+00 : f32
    %8 = vector.broadcast %cst_5 : f32 to vector<16x128xf32>
    %9 = arith.addf %8, %7 : vector<16x128xf32>
    %10 = arith.divf %8, %9 : vector<16x128xf32>
    %11 = arith.mulf %5, %10 : vector<16x128xf32>
    %c0_6 = arith.constant 0 : index
    %c0_7 = arith.constant 0 : index
    %12 = vector.load %arg4[%c0_6, %c0_7] : memref<16x128xf32, #tpu.memory_space<vmem>>, vector<16x128xf32>
    tpu.vector_store %arg4[%c0_6, %c0_7], %11 {strides = array<i32>} : memref<16x128xf32, #tpu.memory_space<vmem>>, vector<16x128xf32>,
    return
  }
  func.func @transform_0(%arg0: i32) -> (i32, i32) {
    %c0_i32 = arith.constant 0 : i32
    %c0_i32_0 = arith.constant 0 : i32
    return %arg0, %c0_i32 : i32, i32
  }
  func.func @transform_1(%arg0: i32) -> (i32, i32) {
    %c0_i32 = arith.constant 0 : i32
    %c0_i32_0 = arith.constant 0 : i32
    %c0_i32_1 = arith.constant 0 : i32
    return %c0_i32, %c0_i32_0 : i32, i32
  }
  func.func @transform_2(%arg0: i32) -> (i32, i32) {
    %c0_i32 = arith.constant 0 : i32
    %c0_i32_0 = arith.constant 0 : i32
    %c0_i32_1 = arith.constant 0 : i32
    return %c0_i32, %c0_i32_0 : i32, i32
  }
  func.func @transform_3(%arg0: i32) -> (i32, i32) {
    %c0_i32 = arith.constant 0 : i32
    %c0_i32_0 = arith.constant 0 : i32
    return %arg0, %c0_i32 : i32, i32
  }
}

</mosaic_0001>

<llo_original>
// kernel: tpu_custom_call.1
$region0: #{tpu_custom_call.1}
  #allocation0 [shape = 'u32[]', space=smem, size = 0x4, offset = 0x4, fixed_abs, tag = 'smem constant byte address 0x4 - core index']
  #allocation1 [shape = 'u32[144,128]{1,0:T(1,128)}', space=vmem, size = 0x12000, scoped, tag = 'internal scratch']
  %s0 = inlined_call_operand.hbm [shape: f32[16,128], index: 0, kind: input, shape index: {}]
  %s1 = inlined_call_operand.hbm [shape: f32[128,128], index: 1, kind: input, shape index: {}]
  %s2 = inlined_call_operand.vmem [shape: f32[1,128], index: 2, kind: input, shape index: {}]
  %s3 = inlined_call_operand.hbm [shape: f32[16,128], index: 3, kind: output, shape index: {}]
  %s4 = sld [smem:[#allocation0]]
  $region30: #{tpu_custom_call.1} parent=0
    _
  %s6 = ssub.s32 1, %s4
  %s7 = scalar_select 0, %s6, %s4
  $region1: #{tpu_custom_call.1} parent=0
    #allocation2 [shape = 'u8[8192]{0}', space=vmem, size = 0x2000, scoped, tag = 'input window, operand 0, single buffered']
    #allocation3 [shape = 's32[1]{0}', space=sflag, size = 0x4, scoped, tag = 'scoped memory for tpu_custom_call.1']
    #allocation4 [shape = 's32[1]{0}', space=sflag, size = 0x4, scoped, tag = 'scoped memory for tpu_custom_call.1']
    #allocation5 [shape = 'u8[65536]{0}', space=vmem, size = 0x10000, scoped, tag = 'input window, operand 1, single buffered']
    #allocation6 [shape = 's32[1]{0}', space=sflag, size = 0x4, scoped, tag = 'scoped memory for tpu_custom_call.1']
    #allocation7 [shape = 'u8[8192]{0}', space=vmem, size = 0x2000, scoped, tag = 'output window, operand 0, single buffered']
    %8 = vsyncpa [#allocation3], 0
    %9 = vsyncpa [#allocation6], 0
    %10 = vsyncpa [#allocation4], 0
    // Predicated region
    $region2: #{tpu_custom_call.1} parent=1 // pred_check
      _
    $region3: #{tpu_custom_call.1} parent=1 // pred_check_branch
      %12 = sbr.rel (0) target = $region5
    $region4: #{tpu_custom_call.1} parent=1 // pred_region
      %s14 = ssub.s32 256, 256
      %15 = vsyncadd [#allocation3], %s14
      %s16 = sshll.u32 [#allocation2], 4
      %s17 = int_to_ptr.vmem [resolvable:$true] %s16
      %22 = dma.hbm_to_vmem [thread:$0]  %s0, 256, %s17, [#allocation3], 128, 128, 8
    $region5: #{tpu_custom_call.1} parent=1 // pred_fallthru
      _
    // Predicated region
    $region6: #{tpu_custom_call.1} parent=1 // pred_check
      _
    $region7: #{tpu_custom_call.1} parent=1 // pred_check_branch
      %24 = sbr.rel (0) target = $region9
    $region8: #{tpu_custom_call.1} parent=1 // pred_region
      %s26 = ssub.s32 2048, 2048
      %27 = vsyncadd [#allocation6], %s26
      %s28 = sshll.u32 [#allocation5], 4
      %s29 = int_to_ptr.vmem [resolvable:$true] %s28
      %34 = dma.hbm_to_vmem [thread:$0]  %s1, 2048, %s29, [#allocation6], 128, 128, 8
    $region9: #{tpu_custom_call.1} parent=1 // pred_fallthru
      _
    // Predicated region
    $region10: #{tpu_custom_call.1} parent=1 // pred_check
      _
    $region11: #{tpu_custom_call.1} parent=1 // pred_check_branch
      %36 = sbr.rel (0) target = $region13
    $region12: #{tpu_custom_call.1} parent=1 // pred_region
      _
    $region13: #{tpu_custom_call.1} parent=1 // pred_fallthru
      _
    // Predicated region
    $region14: #{tpu_custom_call.1} parent=1 // pred_check
      _
    $region15: #{tpu_custom_call.1} parent=1 // pred_check_branch
      %38 = sbr.rel (0) target = $region17
    $region16: #{tpu_custom_call.1} parent=1 // pred_region
      %39 = dma.done [#allocation3], 256
    $region17: #{tpu_custom_call.1} parent=1 // pred_fallthru
      _
    // Predicated region
    $region18: #{tpu_custom_call.1} parent=1 // pred_check
      _
    $region19: #{tpu_custom_call.1} parent=1 // pred_check_branch
      %41 = sbr.rel (0) target = $region21
    $region20: #{tpu_custom_call.1} parent=1 // pred_region
      %42 = dma.done [#allocation6], 2048
    $region21: #{tpu_custom_call.1} parent=1 // pred_fallthru
      _
    %v43 = vld [vmem:[#allocation2] sm:$0xff]
    %v44 = vld [vmem:[#allocation2 + $0x8] sm:$0xff]
    %v45 = vld [vmem:[#allocation5] sm:$0xff]
    %v46 = vld [vmem:[#allocation5 + $0x8] sm:$0xff]
    %v47 = vld [vmem:[#allocation5 + $0x10] sm:$0xff]
    %v48 = vld [vmem:[#allocation5 + $0x18] sm:$0xff]
    %v49 = vld [vmem:[#allocation5 + $0x20] sm:$0xff]
    %v50 = vld [vmem:[#allocation5 + $0x28] sm:$0xff]
    %v51 = vld [vmem:[#allocation5 + $0x30] sm:$0xff]
    %v52 = vld [vmem:[#allocation5 + $0x38] sm:$0xff]
    %v53 = vld [vmem:[#allocation5 + $0x40] sm:$0xff]
    %v54 = vld [vmem:[#allocation5 + $0x48] sm:$0xff]
    %v55 = vld [vmem:[#allocation5 + $0x50] sm:$0xff]
    %v56 = vld [vmem:[#allocation5 + $0x58] sm:$0xff]
    %v57 = vld [vmem:[#allocation5 + $0x60] sm:$0xff]
    %v58 = vld [vmem:[#allocation5 + $0x68] sm:$0xff]
    %v59 = vld [vmem:[#allocation5 + $0x70] sm:$0xff]
    %v60 = vld [vmem:[#allocation5 + $0x78] sm:$0xff]
    %v61 = vld [vmem:[%s2] sm:$0x1]
    %v63 = vlaneseq
    %v64 = vshrl.u32 %v63, 7
    %v65 = vsub.s32 0, %v64
    %v66 = vrot.slane %v61, %v65
    %68 = vmatprep.subr.mxu0 0.0
    %69 = vmatpush1.msra.mxu0 %v60
    %70 = vmatprep.subr.mxu0 0.0
    %71 = vmatpush1.msra.mxu0 %v59
    %72 = vmatprep.subr.mxu0 0.0
    %73 = vmatpush1.msra.mxu0 %v58
    %74 = vmatprep.subr.mxu0 0.0
    %75 = vmatpush1.msra.mxu0 %v57
    %76 = vmatprep.subr.mxu0 0.0
    %77 = vmatpush1.msra.mxu0 %v56
    %78 = vmatprep.subr.mxu0 0.0
    %79 = vmatpush1.msra.mxu0 %v55
    %80 = vmatprep.subr.mxu0 0.0
    %81 = vmatpush1.msra.mxu0 %v54
    %82 = vmatprep.subr.mxu0 0.0
    %83 = vmatpush1.msra.mxu0 %v53
    %84 = vmatprep.subr.mxu0 0.0
    %85 = vmatpush1.msra.mxu0 %v52
    %86 = vmatprep.subr.mxu0 0.0
    %87 = vmatpush1.msra.mxu0 %v51
    %88 = vmatprep.subr.mxu0 0.0
    %89 = vmatpush1.msra.mxu0 %v50
    %90 = vmatprep.subr.mxu0 0.0
    %91 = vmatpush1.msra.mxu0 %v49
    %92 = vmatprep.subr.mxu0 0.0
    %93 = vmatpush1.msra.mxu0 %v48
    %94 = vmatprep.subr.mxu0 0.0
    %95 = vmatpush1.msra.mxu0 %v47
    %96 = vmatprep.subr.mxu0 0.0
    %97 = vmatpush1.msra.mxu0 %v46
    %98 = vmatprep.subr.mxu0 0.0
    %99 = vmatpush1.msra.mxu0 %v45
    %100 = vmatprep.subr.mxu0 0.0
    %101 = vmatpush2.msra.mxu0 0.0
    %102 = vmatprep.subr.mxu0 0.0
    %103 = vmatpush2.msra.mxu0 0.0
    %104 = vmatprep.subr.mxu0 0.0
    %105 = vmatpush2.msra.mxu0 0.0
    %106 = vmatprep.subr.mxu0 0.0
    %107 = vmatpush2.msra.mxu0 0.0
    %108 = vmatprep.subr.mxu0 0.0
    %109 = vmatpush2.msra.mxu0 0.0
    %110 = vmatprep.subr.mxu0 0.0
    %111 = vmatpush2.msra.mxu0 0.0
    %112 = vmatprep.subr.mxu0 0.0
    %113 = vmatpush2.msra.mxu0 0.0
    %114 = vmatprep.subr.mxu0 0.0
    %115 = vmatpush2.msra.mxu0 0.0
    %116 = vmatprep.subr.mxu0 0.0
    %117 = vmatpush2.msra.mxu0 0.0
    %118 = vmatprep.subr.mxu0 0.0
    %119 = vmatpush2.msra.mxu0 0.0
    %120 = vmatprep.subr.mxu0 0.0
    %121 = vmatpush2.msra.mxu0 0.0
    %122 = vmatprep.subr.mxu0 0.0
    %123 = vmatpush2.msra.mxu0 0.0
    %124 = vmatprep.subr.mxu0 0.0
    %125 = vmatpush2.msra.mxu0 0.0
    %126 = vmatprep.subr.mxu0 0.0
    %127 = vmatpush2.msra.mxu0 0.0
    %128 = vmatprep.subr.mxu0 0.0
    %129 = vmatpush2.msra.mxu0 0.0
    %130 = vmatprep.subr.mxu0 0.0
    %131 = vmatpush2.msra.mxu0 0.0
    %132 = vmatprep.mubr.f32.mxu0 0.0
    %133 = vmatmul.mubr.f32.gmra.mxu0 %v43
    %v134 = vpop.f32.mrf.mxu0
    %v135 = vadd.f32 %v66, %v134
    %v136 = vpop.f32.mrf.mxu0
    %137 = vmatprep.mubr.f32.mxu0 0.0
    %138 = vmatmul.mubr.f32.gmra.mxu0 %v44
    %v139 = vpop.f32.mrf.mxu0
    %v140 = vadd.f32 %v66, %v139
    %v141 = vpop.f32.mrf.mxu0
    %142 = vdwg.mxu0
    %v143 = vxor.u32 %v135, 2147483648
    %v144 = vxor.u32 %v140, 2147483648
    %v145 = vmul.f32 %v143, 1.442695
    %v146 = vpow.pop %v145
    %v147 = vmul.f32 %v144, 1.442695
    %v148 = vpow.pop %v147
    %v149 = vadd.f32 %v146, 1.0
    %v150 = vadd.f32 %v148, 1.0
    %v151 = vrcp.pop %v149
    %v152 = vmul.f32 1.0, %v151
    %v153 = vrcp.pop %v150
    %v154 = vmul.f32 1.0, %v153
    %v155 = vmul.f32 %v135, %v152
    %v156 = vmul.f32 %v140, %v154
    %157 = vst [vmem:[#allocation7] sm:$0xff] %v155
    %158 = vst [vmem:[#allocation7 + $0x8] sm:$0xff] %v156
    // Predicated region
    $region22: #{tpu_custom_call.1} parent=1 // pred_check
      _
    $region23: #{tpu_custom_call.1} parent=1 // pred_check_branch
      %160 = sbr.rel (0) target = $region25
    $region24: #{tpu_custom_call.1} parent=1 // pred_region
      %s162 = ssub.s32 256, 256
      %163 = vsyncadd [#allocation4], %s162
      %s164 = sshll.u32 [#allocation7], 4
      %s165 = int_to_ptr.vmem [resolvable:$true] %s164
      %170 = dma.vmem_to_hbm [thread:$0]  %s165, 256, %s3, [#allocation4], 128, 128, 8
    $region25: #{tpu_custom_call.1} parent=1 // pred_fallthru
      _
    // Predicated region
    $region26: #{tpu_custom_call.1} parent=1 // pred_check
      _
    $region27: #{tpu_custom_call.1} parent=1 // pred_check_branch
      %172 = sbr.rel (0) target = $region29
    $region28: #{tpu_custom_call.1} parent=1 // pred_region
      %173 = dma.done [#allocation4], 256
    $region29: #{tpu_custom_call.1} parent=1 // pred_fallthru
      _
    %174 = vsyncpa [#allocation3], 1
    %175 = vsyncpa [#allocation6], 1
    %176 = vsyncpa [#allocation4], 1

</llo_original>
